<compile_context>
chip_gen: v7x
topology: tpu7x:2x2x1
jax: 0.10.0
libtpu: 0.0.40
codegen_flags: <defaults>
</compile_context>

<pallas_src>
import jax
import jax.numpy as jnp
from jax import lax
from jax.experimental import pallas as pl
from jax.experimental.pallas import tpu as pltpu


def _batch_tile(batch):
    """Largest batch tile (<=512 rows) -- amortizes ~0.35us/step grid overhead."""
    return batch if batch <= 512 else 512


def _compiler_params():
    return pltpu.CompilerParams(
        dimension_semantics=("parallel",),   # shard batch tiles across TCs (v7x)
        vmem_limit_bytes=32 * 1024 * 1024,   # explicit budget; tiles use ~KBs
    )


def _forward_kernel(state_ref, w_ref, b_ref, probs_ref):
    """probs = softmax(state @ W + b) for one (TB, D) batch tile."""
    logits = jnp.dot(state_ref[...], w_ref[...],
                     preferred_element_type=jnp.float32) + b_ref[...]
    m = jnp.max(logits, axis=-1, keepdims=True)
    e = jnp.exp(logits - m)
    denom = jnp.sum(e, axis=-1, keepdims=True)
    probs_ref[...] = (e / denom).astype(probs_ref.dtype)


def _sample_kernel(state_ref, w_ref, b_ref, gumbel_ref, action_ref):
    """Categorical sample via Gumbel-argmax directly on raw logits."""
    logits = jnp.dot(state_ref[...], w_ref[...],
                     preferred_element_type=jnp.float32) + b_ref[...]
    # argmax(log softmax(z) + g) == argmax(z + g): per-row logsumexp and max
    # shift are constants under argmax, so no exp/log is needed here.
    scores = logits + gumbel_ref[...]                        # (TB, A)
    # Transpose so the per-row result lands lane-major -> dense (1, TB) store.
    scores_t = scores.T                                      # (A, TB)
    a = scores_t.shape[0]
    smax = jnp.max(scores_t, axis=0, keepdims=True)          # (1, TB)
    row = lax.broadcasted_iota(jnp.int32, scores_t.shape, 0)
    # lowest index among maxima (torch argmax / multinomial tie convention)
    idx = jnp.min(jnp.where(scores_t == smax, row, a), axis=0, keepdims=True)
    action_ref[...] = idx.astype(jnp.int32)


@jax.jit
def policy_forward(state, w, b):
    """softmax(state @ w + b) -> (B, A) float32 probabilities."""
    B, D = state.shape
    A = w.shape[1]
    tb = _batch_tile(B)
    return pl.pallas_call(
        _forward_kernel,
        out_shape=jax.ShapeDtypeStruct((B, A), jnp.float32),
        grid=(pl.cdiv(B, tb),),
        in_specs=[
            pl.BlockSpec((tb, D), lambda i: (i, 0)),
            pl.BlockSpec((D, A), lambda i: (0, 0)),   # weights resident in VMEM
            pl.BlockSpec((1, A), lambda i: (0, 0)),
        ],
        out_specs=pl.BlockSpec((tb, A), lambda i: (i, 0)),
        compiler_params=_compiler_params(),
        cost_estimate=pl.CostEstimate(
            flops=2 * B * D * A,
            transcendentals=B * A,
            bytes_accessed=4 * (B * D + D * A + A + B * A),
        ),
    )(state, w, b)


@jax.jit
def policy_sample(state, w, b, key):
    """multinomial(softmax(state @ w + b), 1) -> (B,) int32 actions."""
    B, D = state.shape
    A = w.shape[1]
    # Per-row Gumbel noise drawn outside the kernel (see TODO above); each
    # batch tile reads its own rows, so tiles are never correlated.
    gumbel = jax.random.gumbel(key, (B, A), jnp.float32)
    tb = _batch_tile(B)
    actions_row = pl.pallas_call(
        _sample_kernel,
        out_shape=jax.ShapeDtypeStruct((1, B), jnp.int32),   # lane-major actions
        grid=(pl.cdiv(B, tb),),
        in_specs=[
            pl.BlockSpec((tb, D), lambda i: (i, 0)),
            pl.BlockSpec((D, A), lambda i: (0, 0)),
            pl.BlockSpec((1, A), lambda i: (0, 0)),
            pl.BlockSpec((tb, A), lambda i: (i, 0)),
        ],
        out_specs=pl.BlockSpec((1, tb), lambda i: (0, i)),
        compiler_params=_compiler_params(),
        cost_estimate=pl.CostEstimate(
            flops=2 * B * D * A,
            transcendentals=0,
            bytes_accessed=4 * (B * D + D * A + A + B * A + B),
        ),
    )(state, w, b, gumbel)
    return actions_row[0]


class PallasPolicy:
    """Mirror of core.policies.Policy with a concrete linear+softmax head."""

    def __init__(self, state_size, action_size, key):
        self.action_size = action_size
        k_w, k_b = jax.random.split(key)
        self.w = jax.random.normal(k_w, (state_size, action_size), jnp.float32) * 0.1
        self.b = jax.random.normal(k_b, (1, action_size), jnp.float32) * 0.01

    def start_new_episode(self):
        pass

    def _policy_size(self, state):
        if state.ndim > 1:
            return (state.shape[0], self.action_size)
        return (self.action_size,)

    def forward(self, state):
        return policy_forward(state, self.w, self.b)

    __call__ = forward

    def sample(self, state, key):
        # torch.multinomial(self(state), 1).squeeze() -> (B,) ints
        return policy_sample(state, self.w, self.b, key)


if __name__ == "__main__":
    root = jax.random.PRNGKey(0)
    k_param, k_state, k_sample = jax.random.split(root, 3)

    batch, state_dim, action_size = 8, 32, 16
    policy = PallasPolicy(state_dim, action_size, k_param)
    state = jax.random.normal(k_state, (batch, state_dim), jnp.float32)

    probs = jax.block_until_ready(policy.forward(state))
    actions = jax.block_until_ready(policy.sample(state, k_sample))

    # sanity checks against the reference semantics
    ref_probs = jax.nn.softmax(state @ policy.w + policy.b, axis=-1)
    assert probs.shape == policy._policy_size(state)
    assert actions.shape == (batch,)
    assert bool(jnp.all(jnp.abs(probs - ref_probs) < 1e-4))
    assert bool(jnp.all(jnp.abs(jnp.sum(probs, axis=-1) - 1.0) < 1e-5))
    assert bool(jnp.all((actions >= 0) & (actions < action_size)))

    print("KERNEL_OK")
</pallas_src>

<mosaic_0001>
module attributes {stable_mosaic.version = 11 : i64} {
  func.func @_forward_kernel(%arg0: i32, %arg1: memref<8x32xf32, #tpu.memory_space<vmem>>, %arg2: memref<32x16xf32, #tpu.memory_space<vmem>>, %arg3: memref<1x16xf32, #tpu.memory_space<vmem>>, %arg4: memref<8x16xf32, #tpu.memory_space<vmem>>) attributes {dimension_semantics = [#tpu.dimension_semantics<parallel>], iteration_bounds = array<i64: 1>, scalar_prefetch = 0 : i64, scratch_operands = 0 : i64, tpu.core_type = #tpu.core_type<tc>, window_params = [{transform_indices = @transform_0, window_bounds = array<i64: 8, 32>}, {pipeline_mode = #tpu.pipeline_mode<synchronous>, transform_indices = @transform_1, window_bounds = array<i64: 32, 16>}, {pipeline_mode = #tpu.pipeline_mode<synchronous>, transform_indices = @transform_2, window_bounds = array<i64: 1, 16>}, {transform_indices = @transform_3, window_bounds = array<i64: 8, 16>}]} {
    %c0 = arith.constant 0 : index
    %c0_0 = arith.constant 0 : index
    %0 = vector.load %arg1[%c0, %c0_0] : memref<8x32xf32, #tpu.memory_space<vmem>>, vector<8x32xf32>
    %c0_1 = arith.constant 0 : index
    %c0_2 = arith.constant 0 : index
    %1 = vector.load %arg2[%c0_1, %c0_2] : memref<32x16xf32, #tpu.memory_space<vmem>>, vector<32x16xf32>
    %cst = arith.constant dense<0.000000e+00> : vector<8x16xf32>
    %2 = tpu.matmul %0, %1, %cst {dimension_numbers = #tpu.dot_dimension_numbers<[1], [0], [0], [1], [0, 0, 1, 1], [], []>} : vector<8x32xf32>, vector<32x16xf32>, vector<8x16xf32> -> vector<8x16xf32>
    %c0_3 = arith.constant 0 : index
    %c0_4 = arith.constant 0 : index
    %3 = vector.load %arg3[%c0_3, %c0_4] : memref<1x16xf32, #tpu.memory_space<vmem>>, vector<1x16xf32>
    %4 = vector.broadcast %3 : vector<1x16xf32> to vector<8x16xf32>
    %5 = arith.addf %2, %4 : vector<8x16xf32>
    %cst_5 = arith.constant dense<0xFF800000> : vector<8xf32>
    %6 = vector.multi_reduction <maximumf>, %5, %cst_5 [1] : vector<8x16xf32> to vector<8xf32>
    %7 = vector.shape_cast %6 : vector<8xf32> to vector<8x1xf32>
    %8 = vector.broadcast %7 : vector<8x1xf32> to vector<8x16xf32>
    %9 = arith.subf %5, %8 : vector<8x16xf32>
    %10 = math.exp %9 : vector<8x16xf32>
    %cst_6 = arith.constant dense<0.000000e+00> : vector<8xf32>
    %11 = vector.multi_reduction <add>, %10, %cst_6 [1] : vector<8x16xf32> to vector<8xf32>
    %12 = vector.shape_cast %11 : vector<8xf32> to vector<8x1xf32>
    %13 = vector.broadcast %12 : vector<8x1xf32> to vector<8x16xf32>
    %14 = arith.divf %10, %13 : vector<8x16xf32>
    %c0_7 = arith.constant 0 : index
    %c0_8 = arith.constant 0 : index
    %15 = vector.load %arg4[%c0_7, %c0_8] : memref<8x16xf32, #tpu.memory_space<vmem>>, vector<8x16xf32>
    tpu.vector_store %arg4[%c0_7, %c0_8], %14 {strides = array<i32>} : memref<8x16xf32, #tpu.memory_space<vmem>>, vector<8x16xf32>,
    return
  }
  func.func @transform_0(%arg0: i32) -> (i32, i32) {
    %c0_i32 = arith.constant 0 : i32
    %c0_i32_0 = arith.constant 0 : i32
    return %arg0, %c0_i32 : i32, i32
  }
  func.func @transform_1(%arg0: i32) -> (i32, i32) {
    %c0_i32 = arith.constant 0 : i32
    %c0_i32_0 = arith.constant 0 : i32
    %c0_i32_1 = arith.constant 0 : i32
    return %c0_i32, %c0_i32_0 : i32, i32
  }
  func.func @transform_2(%arg0: i32) -> (i32, i32) {
    %c0_i32 = arith.constant 0 : i32
    %c0_i32_0 = arith.constant 0 : i32
    %c0_i32_1 = arith.constant 0 : i32
    return %c0_i32, %c0_i32_0 : i32, i32
  }
  func.func @transform_3(%arg0: i32) -> (i32, i32) {
    %c0_i32 = arith.constant 0 : i32
    %c0_i32_0 = arith.constant 0 : i32
    return %arg0, %c0_i32 : i32, i32
  }
}

</mosaic_0001>

<llo_original>
// kernel: policy_forward.1
$region0: #{policy_forward.1}
  #allocation0 [shape = 'u32[]', space=smem, size = 0x4, offset = 0x4, fixed_abs, tag = 'smem constant byte address 0x4 - core index']
  #allocation1 [shape = 'u32[144,128]{1,0:T(1,128)}', space=vmem, size = 0x12000, scoped, tag = 'internal scratch']
  %s0 = inlined_call_operand.vmem [shape: f32[8,32], index: 0, kind: input, shape index: {}]
  %s1 = inlined_call_operand.vmem [shape: f32[32,16], index: 1, kind: input, shape index: {}]
  %s2 = inlined_call_operand.vmem [shape: f32[1,16], index: 2, kind: input, shape index: {}]
  %s3 = inlined_call_operand.hbm [shape: f32[8,16], index: 3, kind: output, shape index: {}]
  %s4 = sld [smem:[#allocation0]]
  $region22: #{policy_forward.1} parent=0
    _
  %s6 = ssub.s32 1, %s4
  %s7 = scalar_select 0, %s6, %s4
  $region1: #{policy_forward.1} parent=0
    #allocation2 [shape = 'u8[4096]{0}', space=vmem, size = 0x1000, scoped, tag = 'output window, operand 0, single buffered']
    #allocation3 [shape = 's32[1]{0}', space=sflag, size = 0x4, scoped, tag = 'scoped memory for policy_forward.1']
    %8 = vsyncpa [#allocation3], 0
    // Predicated region
    $region2: #{policy_forward.1} parent=1 // pred_check
      _
    $region3: #{policy_forward.1} parent=1 // pred_check_branch
      %10 = sbr.rel (0) target = $region5
    $region4: #{policy_forward.1} parent=1 // pred_region
      _
    $region5: #{policy_forward.1} parent=1 // pred_fallthru
      _
    // Predicated region
    $region6: #{policy_forward.1} parent=1 // pred_check
      _
    $region7: #{policy_forward.1} parent=1 // pred_check_branch
      %12 = sbr.rel (0) target = $region9
    $region8: #{policy_forward.1} parent=1 // pred_region
      _
    $region9: #{policy_forward.1} parent=1 // pred_fallthru
      _
    // Predicated region
    $region10: #{policy_forward.1} parent=1 // pred_check
      _
    $region11: #{policy_forward.1} parent=1 // pred_check_branch
      %14 = sbr.rel (0) target = $region13
    $region12: #{policy_forward.1} parent=1 // pred_region
      _
    $region13: #{policy_forward.1} parent=1 // pred_fallthru
      _
    %v15 = vld [vmem:[%s0] sm:$0xff]
    %v16 = vld [vmem:[%s1] sm:$0xff]
    %v17 = vld [vmem:[%s1 + $0x8] sm:$0xff]
    %v18 = vld [vmem:[%s1 + $0x10] sm:$0xff]
    %v19 = vld [vmem:[%s1 + $0x18] sm:$0xff]
    %v20 = vld [vmem:[%s2] sm:$0x1]
    %v22 = vlaneseq
    %v23 = vshrl.u32 %v22, 7
    %v24 = vsub.s32 0, %v23
    %v25 = vrot.slane %v20, %v24
    %vm27 = vcmask 261120
    %v29 = vsel %vm27, %v15, 0
    %31 = vmatprep.subr.mxu0 0.0
    %32 = vmatpush1.msra.mxu0 %v16
    %33 = vmatprep.subr.mxu0 0.0
    %34 = vmatpush1.msra.mxu0 %v17
    %35 = vmatprep.subr.mxu0 0.0
    %36 = vmatpush1.msra.mxu0 %v18
    %37 = vmatprep.subr.mxu0 0.0
    %38 = vmatpush1.msra.mxu0 %v19
    %39 = vmatprep.subr.mxu0 0.0
    %40 = vmatpush1.msra.mxu0 0.0
    %41 = vmatprep.subr.mxu0 0.0
    %42 = vmatpush1.msra.mxu0 0.0
    %43 = vmatprep.subr.mxu0 0.0
    %44 = vmatpush1.msra.mxu0 0.0
    %45 = vmatprep.subr.mxu0 0.0
    %46 = vmatpush1.msra.mxu0 0.0
    %47 = vmatprep.subr.mxu0 0.0
    %48 = vmatpush1.msra.mxu0 0.0
    %49 = vmatprep.subr.mxu0 0.0
    %50 = vmatpush1.msra.mxu0 0.0
    %51 = vmatprep.subr.mxu0 0.0
    %52 = vmatpush1.msra.mxu0 0.0
    %53 = vmatprep.subr.mxu0 0.0
    %54 = vmatpush1.msra.mxu0 0.0
    %55 = vmatprep.subr.mxu0 0.0
    %56 = vmatpush1.msra.mxu0 0.0
    %57 = vmatprep.subr.mxu0 0.0
    %58 = vmatpush1.msra.mxu0 0.0
    %59 = vmatprep.subr.mxu0 0.0
    %60 = vmatpush1.msra.mxu0 0.0
    %61 = vmatprep.subr.mxu0 0.0
    %62 = vmatpush1.msra.mxu0 0.0
    %63 = vmatprep.subr.mxu0 0.0
    %64 = vmatpush1.msra.mxu0 0.0
    %65 = vmatprep.subr.mxu0 0.0
    %66 = vmatpush1.msra.mxu0 0.0
    %67 = vmatprep.subr.mxu0 0.0
    %68 = vmatpush1.msra.mxu0 0.0
    %69 = vmatprep.subr.mxu0 0.0
    %70 = vmatpush1.msra.mxu0 0.0
    %71 = vmatprep.subr.mxu0 0.0
    %72 = vmatpush1.msra.mxu0 0.0
    %73 = vmatprep.subr.mxu0 0.0
    %74 = vmatpush1.msra.mxu0 0.0
    %75 = vmatprep.subr.mxu0 0.0
    %76 = vmatpush1.msra.mxu0 0.0
    %77 = vmatprep.subr.mxu0 0.0
    %78 = vmatpush1.msra.mxu0 0.0
    %79 = vmatprep.subr.mxu0 0.0
    %80 = vmatpush1.msra.mxu0 0.0
    %81 = vmatprep.subr.mxu0 0.0
    %82 = vmatpush1.msra.mxu0 0.0
    %83 = vmatprep.subr.mxu0 0.0
    %84 = vmatpush1.msra.mxu0 0.0
    %85 = vmatprep.subr.mxu0 0.0
    %86 = vmatpush1.msra.mxu0 0.0
    %87 = vmatprep.subr.mxu0 0.0
    %88 = vmatpush1.msra.mxu0 0.0
    %89 = vmatprep.subr.mxu0 0.0
    %90 = vmatpush1.msra.mxu0 0.0
    %91 = vmatprep.subr.mxu0 0.0
    %92 = vmatpush1.msra.mxu0 0.0
    %93 = vmatprep.subr.mxu0 0.0
    %94 = vmatpush1.msra.mxu0 0.0
    %95 = vmatprep.mubr.f32.mxu0 0.0
    %96 = vmatmul.mubr.f32.gmra.mrb[0].mxu0 %v29
    %v97 = vpop.f32.mrb[0].mxu0
    %v98 = vadd.f32 %v25, %v97
    %v99 = vpop.f32.mrb[0].mxu0
    %100 = vdwg.mxu0
    %vm101 = vcmask 130048
    %v102 = vsel %vm101, %v98, -inf
    %103 = vmax.xlane.f32.xlu0 %v102
    %v104 = vpop.xlane.xlu0 %103
    %v105 = vsub.f32 %v98, %v104
    %v106 = vmul.f32 %v105, 1.442695
    %v107 = vpow.pop %v106
    %v108 = vsel %vm101, %v107, 0.0
    %109 = vadd.xlane.f32.xlu0 %v108
    %v110 = vpop.xlane.xlu0 %109
    %v111 = vrcp.pop %v110
    %v112 = vmul.f32 %v107, %v111
    %113 = vst.msk [vmem:[#allocation2] sm:$0xff] %vm101, %v112
    // Predicated region
    $region14: #{policy_forward.1} parent=1 // pred_check
      _
    $region15: #{policy_forward.1} parent=1 // pred_check_branch
      %115 = sbr.rel (0) target = $region17
    $region16: #{policy_forward.1} parent=1 // pred_region
      %s117 = ssub.s32 128, 128
      %118 = vsyncadd [#allocation3], %s117
      %s120 = sshll.u32 [#allocation2], 4
      %s121 = int_to_ptr.vmem [resolvable:$true] %s120
      %123 = dma.vmem_to_hbm [thread:$0]  %s121, 128, %s3, [#allocation3]
    $region17: #{policy_forward.1} parent=1 // pred_fallthru
      _
    // Predicated region
    $region18: #{policy_forward.1} parent=1 // pred_check
      _
    $region19: #{policy_forward.1} parent=1 // pred_check_branch
      %125 = sbr.rel (0) target = $region21
    $region20: #{policy_forward.1} parent=1 // pred_region
      %126 = dma.done [#allocation3], 128
    $region21: #{policy_forward.1} parent=1 // pred_fallthru
      _
    %127 = vsyncpa [#allocation3], 1

</llo_original>
